<compile_context>
chip_gen: v6e
topology: v6e:2x2x1
jax: 0.10.0
libtpu: 0.0.40
codegen_flags: <defaults>
</compile_context>

<pallas_src>
import jax
import jax.numpy as jnp
from jax import lax
from jax.experimental import pallas as pl
from jax.experimental.pallas import tpu as pltpu

EPS = 1e-6
_MIB = 1024 * 1024


# --------------------------------------------------------------------------
# Per-chip VMEM budgeting.
# --------------------------------------------------------------------------
def _vmem_budget():
    """Returns (vmem_limit_bytes, per-buffer tile budget) for this chip."""
    try:
        cap = int(pltpu.get_tpu_info().vmem_capacity_bytes)
    except Exception:
        cap = 64 * _MIB                      # conservative fallback (v7x-sized)
    # Never request the whole physical VMEM: leave >=16 MiB headroom for
    # Mosaic internal scratch / semaphores (critical on v7x's 64 MiB).
    limit = min(max(cap - 16 * _MIB, 32 * _MIB), 64 * _MIB)
    # Bigger tiles on the 128-MiB chips (v5e/v6e), smaller on v7x.
    per_buffer = 8 * _MIB if cap >= 100 * _MIB else 4 * _MIB
    return limit, per_buffer


def _choose_seq_tile(S, H, dtype, per_buffer_budget):
    """Largest seq tile fitting the budget, sublane-pack aligned, preferring TS | S."""
    itemsize = jnp.dtype(dtype).itemsize
    pack = max(8, 32 // itemsize)            # 8 for f32, 16 for bf16, 32 for int8/fp8
    ts = per_buffer_budget // max(1, H * itemsize)
    ts = max(pack, (ts // pack) * pack)
    if ts >= S:
        return S                             # full-extent block (always legal)
    # Prefer a tile that divides S so the last grid step is not a masked,
    # ragged partial tile; only accept divisors within ~2x of the budget tile.
    t = ts
    while t >= max(pack, ts // 2):
        if S % t == 0:
            return t
        t -= pack
    return ts


def _choose_n_tile(H, N, itemsize, budget=4 * _MIB):
    """Output tile (multiple of 128) for the second Linear's N = 2H dimension."""
    tn = budget // max(1, H * itemsize)
    tn = max(128, (tn // 128) * 128)
    tn = min(tn, N)
    if N % tn:
        t = tn
        while t >= 128:
            if N % t == 0:
                return t
            t -= 128
    return tn


# --------------------------------------------------------------------------
# Kernel 1: conditioning MLP (Linear -> SiLU -> Linear), tiled over 2H.
# --------------------------------------------------------------------------
def _cond_mlp_kernel(c_ref, w1_ref, b1_ref, w2_ref, b2_ref, gb_ref, h_ref):
    # Step 0: hidden activation h = silu(c @ w1 + b1), cached in VMEM scratch.
    @pl.when(pl.program_id(0) == 0)
    def _():
        h = jnp.dot(c_ref[...], w1_ref[...], preferred_element_type=jnp.float32)
        h = h + b1_ref[...]
        h = h * jax.nn.sigmoid(h)                               # SiLU
        h_ref[...] = h.astype(h_ref.dtype)

    # Every step: one N-tile of the second Linear (gamma/beta fused as 2H).
    gb = jnp.dot(h_ref[...], w2_ref[...], preferred_element_type=jnp.float32)
    gb_ref[...] = (gb + b2_ref[...]).astype(gb_ref.dtype)


def _cond_mlp(c, w1, b1, w2, b2_adj, H, compute_dtype, vmem_limit):
    B, C = c.shape
    N = 2 * H
    cd = jnp.dtype(compute_dtype)
    c_c, w1_c, w2_c = c.astype(cd), w1.astype(cd), w2.astype(cd)
    b1_f = b1.astype(jnp.float32)

    TN = _choose_n_tile(H, N, cd.itemsize)
    NT = pl.cdiv(N, TN)

    # TODO(synk): for extreme C*H, tile the first Linear's weight (C, H) too;
    # here it stays resident in VMEM (already halved by the bf16 cast).
    return pl.pallas_call(
        _cond_mlp_kernel,
        out_shape=jax.ShapeDtypeStruct((B, N), jnp.float32),
        grid_spec=pltpu.PrefetchScalarGridSpec(
            num_scalar_prefetch=0,
            grid=(NT,),
            in_specs=[
                pl.BlockSpec((B, C), lambda n: (0, 0)),         # c   (resident)
                pl.BlockSpec((C, H), lambda n: (0, 0)),         # w1  (resident)
                pl.BlockSpec((1, H), lambda n: (0, 0)),         # b1  (resident)
                pl.BlockSpec((H, TN), lambda n: (0, n)),        # w2  N-tile
                pl.BlockSpec((1, TN), lambda n: (0, n)),        # b2  N-tile
            ],
            out_specs=pl.BlockSpec((B, TN), lambda n: (0, n)),
            scratch_shapes=[pltpu.VMEM((B, H), cd)],            # cached hidden h
        ),
        compiler_params=pltpu.CompilerParams(
            dimension_semantics=("arbitrary",),  # step 0 must fill the h scratch
            vmem_limit_bytes=vmem_limit,
        ),
    )(c_c, w1_c, b1_f, w2_c, b2_adj)


# --------------------------------------------------------------------------
# Kernel 2: LayerNorm (over H) + adaptive modulation, single-pass moments.
# --------------------------------------------------------------------------
def _adaln_kernel(gp1_ref, beta_ref, x_ref, o_ref):
    x = x_ref[...].astype(jnp.float32)                          # (TS, H)
    inv_h = 1.0 / x.shape[-1]
    s1 = jnp.sum(x, axis=-1, keepdims=True)
    s2 = jnp.sum(x * x, axis=-1, keepdims=True)
    mean = s1 * inv_h
    var = jnp.maximum(s2 * inv_h - mean * mean, 0.0)
    xn = (x - mean) * lax.rsqrt(var + EPS)
    o_ref[...] = (xn * gp1_ref[...] + beta_ref[...]).astype(o_ref.dtype)


def ada_layernorm(x, c, w1, b1, w2, b2, *, mlp_compute_dtype=jnp.bfloat16):
    """x: (B, S, H), c: (B, C).  Matches AdaLayerNorm.forward for 3-D x."""
    B, S, H = x.shape
    vmem_limit, per_buffer = _vmem_budget()

    # Fold the "+1" of (1 + gamma) into the second Linear's bias so the cond
    # MLP directly emits [1 + gamma | beta]; the wrapper only slices.
    ones_zeros = jnp.concatenate(
        [jnp.ones((1, H), jnp.float32), jnp.zeros((1, H), jnp.float32)], axis=-1)
    b2_adj = b2.astype(jnp.float32) + ones_zeros

    gb = _cond_mlp(c, w1, b1, w2, b2_adj, H, mlp_compute_dtype, vmem_limit)
    gp1 = gb[:, :H].reshape(B, 1, H)     # 1 + gamma (lane-aligned slice when H % 128 == 0)
    beta = gb[:, H:].reshape(B, 1, H)

    TS = _choose_seq_tile(S, H, x.dtype, per_buffer)
    nst = pl.cdiv(S, TS)

    # TODO(synk): if production H is not a multiple of 128, pad H in the model so
    # the output store stays lane-dense (avoids masked vst.msk partial stores).
    out = pl.pallas_call(
        _adaln_kernel,
        out_shape=jax.ShapeDtypeStruct((B, S, H), x.dtype),
        grid_spec=pltpu.PrefetchScalarGridSpec(
            num_scalar_prefetch=0,
            # One flattened parallel axis: shards evenly across v7x's 2 TCs
            # even when B is 1 or odd (neutral on v5e/v6e).
            grid=(B * nst,),
            in_specs=[
                pl.BlockSpec((None, 1, H), lambda i: (i // nst, 0, 0)),        # 1+gamma
                pl.BlockSpec((None, 1, H), lambda i: (i // nst, 0, 0)),        # beta
                pl.BlockSpec((None, TS, H), lambda i: (i // nst, i % nst, 0)),  # x tile
            ],
            out_specs=pl.BlockSpec((None, TS, H),
                                   lambda i: (i // nst, i % nst, 0)),
        ),
        compiler_params=pltpu.CompilerParams(
            dimension_semantics=("parallel",),
            vmem_limit_bytes=vmem_limit,
        ),
    )(gp1, beta, x)
    return out


# --------------------------------------------------------------------------
# Pure-JAX reference mirroring the PyTorch forward.
# --------------------------------------------------------------------------
def ada_layernorm_ref(x, c, w1, b1, w2, b2):
    h = jax.nn.silu(c @ w1 + b1[0])
    gb = h @ w2 + b2[0]
    H = x.shape[-1]
    gamma = gb[:, :H][:, None, :]
    beta = gb[:, H:][:, None, :]
    mean = jnp.mean(x, axis=-1, keepdims=True)
    var = jnp.mean((x - mean) ** 2, axis=-1, keepdims=True)
    xn = (x - mean) / jnp.sqrt(var + EPS)
    return xn * (1.0 + gamma) + beta


if __name__ == "__main__":
    # Small but lane-dense shapes (H multiple of 128 keeps the store path unmasked).
    B, S, H, C = 2, 16, 128, 32

    key = jax.random.PRNGKey(0)
    kx, kc, kw1, kb1, kw2, kb2 = jax.random.split(key, 6)

    x = jax.random.normal(kx, (B, S, H), dtype=jnp.float32)
    c = jax.random.normal(kc, (B, C), dtype=jnp.float32)

    w1 = jax.random.normal(kw1, (C, H), dtype=jnp.float32) * 0.05
    b1 = jax.random.normal(kb1, (1, H), dtype=jnp.float32) * 0.05

    # Case 1: module's default init (zero second Linear) -> output == LayerNorm(x).
    w2_zero = jnp.zeros((H, 2 * H), dtype=jnp.float32)
    b2_zero = jnp.zeros((1, 2 * H), dtype=jnp.float32)
    out = jax.block_until_ready(ada_layernorm(x, c, w1, b1, w2_zero, b2_zero))
    ref = ada_layernorm_ref(x, c, w1, b1, w2_zero, b2_zero)
    assert out.shape == (B, S, H)
    assert jnp.allclose(out, ref, atol=1e-5, rtol=1e-5), "mismatch (zero-init)"

    # Case 2: non-zero second Linear, default bf16 MXU compute in the cond MLP.
    w2 = jax.random.normal(kw2, (H, 2 * H), dtype=jnp.float32) * 0.05
    b2 = jax.random.normal(kb2, (1, 2 * H), dtype=jnp.float32) * 0.05
    out2 = jax.block_until_ready(ada_layernorm(x, c, w1, b1, w2, b2))
    ref2 = ada_layernorm_ref(x, c, w1, b1, w2, b2)
    assert jnp.allclose(out2, ref2, atol=1e-2, rtol=1e-2), "mismatch (bf16 MLP)"

    # Case 3: same weights, f32 compute in the cond MLP -> tight tolerance.
    out3 = jax.block_until_ready(
        ada_layernorm(x, c, w1, b1, w2, b2, mlp_compute_dtype=jnp.float32))
    assert jnp.allclose(out3, ref2, atol=1e-5, rtol=1e-5), "mismatch (f32 MLP)"

    print("KERNEL_OK")
</pallas_src>

<mosaic_0001>
module attributes {stable_mosaic.version = 11 : i64} {
  func.func @_cond_mlp_kernel(%arg0: i32, %arg1: memref<2x32xbf16, #tpu.memory_space<vmem>>, %arg2: memref<32x128xbf16, #tpu.memory_space<vmem>>, %arg3: memref<1x128xf32, #tpu.memory_space<vmem>>, %arg4: memref<128x256xbf16, #tpu.memory_space<vmem>>, %arg5: memref<1x256xf32, #tpu.memory_space<vmem>>, %arg6: memref<2x256xf32, #tpu.memory_space<vmem>>, %arg7: memref<2x128xbf16, #tpu.memory_space<vmem>>) attributes {dimension_semantics = [#tpu.dimension_semantics<arbitrary>], iteration_bounds = array<i64: 1>, scalar_prefetch = 0 : i64, scratch_operands = 1 : i64, tpu.core_type = #tpu.core_type<tc>, window_params = [{pipeline_mode = #tpu.pipeline_mode<synchronous>, transform_indices = @transform_0, window_bounds = array<i64: 2, 32>}, {pipeline_mode = #tpu.pipeline_mode<synchronous>, transform_indices = @transform_1, window_bounds = array<i64: 32, 128>}, {pipeline_mode = #tpu.pipeline_mode<synchronous>, transform_indices = @transform_2, window_bounds = array<i64: 1, 128>}, {transform_indices = @transform_3, window_bounds = array<i64: 128, 256>}, {transform_indices = @transform_4, window_bounds = array<i64: 1, 256>}, {transform_indices = @transform_5, window_bounds = array<i64: 2, 256>}]} {
    %c0_i32 = arith.constant 0 : i32
    %0 = arith.cmpi eq, %arg0, %c0_i32 : i32
    %1 = arith.extui %0 : i1 to i32
    %c0_i32_0 = arith.constant 0 : i32
    %2 = arith.cmpi ne, %1, %c0_i32_0 : i32
    scf.if %2 {
      %c0_8 = arith.constant 0 : index
      %c0_9 = arith.constant 0 : index
      %10 = vector.load %arg1[%c0_8, %c0_9] : memref<2x32xbf16, #tpu.memory_space<vmem>>, vector<2x32xbf16>
      %c0_10 = arith.constant 0 : index
      %c0_11 = arith.constant 0 : index
      %11 = vector.load %arg2[%c0_10, %c0_11] : memref<32x128xbf16, #tpu.memory_space<vmem>>, vector<32x128xbf16>
      %cst_12 = arith.constant dense<0.000000e+00> : vector<2x128xf32>
      %12 = tpu.matmul %10, %11, %cst_12 {dimension_numbers = #tpu.dot_dimension_numbers<[1], [0], [0], [1], [0, 0, 1, 1], [], []>} : vector<2x32xbf16>, vector<32x128xbf16>, vector<2x128xf32> -> vector<2x128xf32>
      %c0_13 = arith.constant 0 : index
      %c0_14 = arith.constant 0 : index
      %13 = vector.load %arg3[%c0_13, %c0_14] : memref<1x128xf32, #tpu.memory_space<vmem>>, vector<1x128xf32>
      %14 = vector.broadcast %13 : vector<1x128xf32> to vector<2x128xf32>
      %15 = arith.addf %12, %14 : vector<2x128xf32>
      %16 = arith.negf %15 : vector<2x128xf32>
      %17 = math.exp %16 : vector<2x128xf32>
      %cst_15 = arith.constant 1.000000e+00 : f32
      %18 = vector.broadcast %cst_15 : f32 to vector<2x128xf32>
      %19 = arith.addf %18, %17 : vector<2x128xf32>
      %20 = arith.divf %18, %19 : vector<2x128xf32>
      %21 = arith.mulf %15, %20 : vector<2x128xf32>
      %22 = arith.truncf %21 : vector<2x128xf32> to vector<2x128xbf16>
      %c0_16 = arith.constant 0 : index
      %c0_17 = arith.constant 0 : index
      %23 = vector.load %arg7[%c0_16, %c0_17] : memref<2x128xbf16, #tpu.memory_space<vmem>>, vector<2x128xbf16>
      tpu.vector_store %arg7[%c0_16, %c0_17], %22 {strides = array<i32>} : memref<2x128xbf16, #tpu.memory_space<vmem>>, vector<2x128xbf16>,
    } else {
    }
    %c0 = arith.constant 0 : index
    %c0_1 = arith.constant 0 : index
    %3 = vector.load %arg7[%c0, %c0_1] : memref<2x128xbf16, #tpu.memory_space<vmem>>, vector<2x128xbf16>
    %c0_2 = arith.constant 0 : index
    %c0_3 = arith.constant 0 : index
    %4 = vector.load %arg4[%c0_2, %c0_3] : memref<128x256xbf16, #tpu.memory_space<vmem>>, vector<128x256xbf16>
    %cst = arith.constant dense<0.000000e+00> : vector<2x256xf32>
    %5 = tpu.matmul %3, %4, %cst {dimension_numbers = #tpu.dot_dimension_numbers<[1], [0], [0], [1], [0, 0, 1, 1], [], []>} : vector<2x128xbf16>, vector<128x256xbf16>, vector<2x256xf32> -> vector<2x256xf32>
    %c0_4 = arith.constant 0 : index
    %c0_5 = arith.constant 0 : index
    %6 = vector.load %arg5[%c0_4, %c0_5] : memref<1x256xf32, #tpu.memory_space<vmem>>, vector<1x256xf32>
    %7 = vector.broadcast %6 : vector<1x256xf32> to vector<2x256xf32>
    %8 = arith.addf %5, %7 : vector<2x256xf32>
    %c0_6 = arith.constant 0 : index
    %c0_7 = arith.constant 0 : index
    %9 = vector.load %arg6[%c0_6, %c0_7] : memref<2x256xf32, #tpu.memory_space<vmem>>, vector<2x256xf32>
    tpu.vector_store %arg6[%c0_6, %c0_7], %8 {strides = array<i32>} : memref<2x256xf32, #tpu.memory_space<vmem>>, vector<2x256xf32>,
    return
  }
  func.func @transform_0(%arg0: i32) -> (i32, i32) {
    %c0_i32 = arith.constant 0 : i32
    %c0_i32_0 = arith.constant 0 : i32
    %c0_i32_1 = arith.constant 0 : i32
    return %c0_i32, %c0_i32_0 : i32, i32
  }
  func.func @transform_1(%arg0: i32) -> (i32, i32) {
    %c0_i32 = arith.constant 0 : i32
    %c0_i32_0 = arith.constant 0 : i32
    %c0_i32_1 = arith.constant 0 : i32
    return %c0_i32, %c0_i32_0 : i32, i32
  }
  func.func @transform_2(%arg0: i32) -> (i32, i32) {
    %c0_i32 = arith.constant 0 : i32
    %c0_i32_0 = arith.constant 0 : i32
    %c0_i32_1 = arith.constant 0 : i32
    return %c0_i32, %c0_i32_0 : i32, i32
  }
  func.func @transform_3(%arg0: i32) -> (i32, i32) {
    %c0_i32 = arith.constant 0 : i32
    %c0_i32_0 = arith.constant 0 : i32
    return %c0_i32, %arg0 : i32, i32
  }
  func.func @transform_4(%arg0: i32) -> (i32, i32) {
    %c0_i32 = arith.constant 0 : i32
    %c0_i32_0 = arith.constant 0 : i32
    return %c0_i32, %arg0 : i32, i32
  }
  func.func @transform_5(%arg0: i32) -> (i32, i32) {
    %c0_i32 = arith.constant 0 : i32
    %c0_i32_0 = arith.constant 0 : i32
    return %c0_i32, %arg0 : i32, i32
  }
}

</mosaic_0001>

<llo_original>
// kernel: tpu_custom_call.1
$region0: #{tpu_custom_call.1}
  #allocation0 [shape = 'u32[]', space=smem, size = 0x4, offset = 0x4, fixed_abs, tag = 'smem constant byte address 0x4 - core index']
  #allocation1 [shape = 'u32[144,128]{1,0:T(1,128)}', space=vmem, size = 0x12000, scoped, tag = 'internal scratch']
  #allocation2 [shape = 'bf16[2,128]{1,0:T(2,128)(2,1)}', space=vmem, size = 0x200, scoped, tag = 'scratch operand']
  %s0 = inlined_call_operand.hbm [shape: bf16[2,32], index: 0, kind: input, shape index: {}]
  %s1 = inlined_call_operand.hbm [shape: bf16[32,128], index: 1, kind: input, shape index: {}]
  %s2 = inlined_call_operand.vmem [shape: f32[1,128], index: 2, kind: input, shape index: {}]
  %s3 = inlined_call_operand.hbm [shape: bf16[128,256], index: 3, kind: input, shape index: {}]
  %s4 = inlined_call_operand.vmem [shape: f32[1,256], index: 4, kind: input, shape index: {}]
  %s5 = inlined_call_operand.hbm [shape: f32[2,256], index: 5, kind: output, shape index: {}]
  %s6 = sld [smem:[#allocation0]]
  $region46: #{tpu_custom_call.1} parent=0
    _
  %s8 = ssub.s32 1, %s6
  %s9 = scalar_select 0, %s8, %s6
  $region1: #{tpu_custom_call.1} parent=0
    #allocation3 [shape = 'u8[512]{0}', space=vmem, size = 0x400, scoped, tag = 'input window, operand 0, single buffered']
    #allocation4 [shape = 's32[1]{0}', space=sflag, size = 0x4, scoped, tag = 'scoped memory for tpu_custom_call.1']
    #allocation5 [shape = 's32[1]{0}', space=sflag, size = 0x4, scoped, tag = 'scoped memory for tpu_custom_call.1']
    #allocation6 [shape = 'u8[8192]{0}', space=vmem, size = 0x2000, scoped, tag = 'input window, operand 1, single buffered']
    #allocation7 [shape = 's32[1]{0}', space=sflag, size = 0x4, scoped, tag = 'scoped memory for tpu_custom_call.1']
    #allocation8 [shape = 'u8[65536]{0}', space=vmem, size = 0x10000, scoped, tag = 'input window, operand 3, single buffered']
    #allocation9 [shape = 'u8[2048]{0}', space=vmem, size = 0x800, scoped, tag = 'output window, operand 0, single buffered']
    %10 = vsyncpa [#allocation4], 0
    %11 = vsyncpa [#allocation7], 0
    %12 = vsyncpa [#allocation5], 0
    // Predicated region
    $region2: #{tpu_custom_call.1} parent=1 // pred_check
      _
    $region3: #{tpu_custom_call.1} parent=1 // pred_check_branch
      %14 = sbr.rel (0) target = $region5
    $region4: #{tpu_custom_call.1} parent=1 // pred_region
      %s16 = ssub.s32 16, 16
      %17 = vsyncadd [#allocation4], %s16
      %s19 = sshll.u32 [#allocation3], 4
      %s20 = int_to_ptr.vmem [resolvable:$true] %s19
      %22 = dma.hbm_to_vmem [thread:$0]  %s0, 16, %s20, [#allocation4]
    $region5: #{tpu_custom_call.1} parent=1 // pred_fallthru
      _
    // Predicated region
    $region6: #{tpu_custom_call.1} parent=1 // pred_check
      _
    $region7: #{tpu_custom_call.1} parent=1 // pred_check_branch
      %24 = sbr.rel (0) target = $region9
    $region8: #{tpu_custom_call.1} parent=1 // pred_region
      %s26 = ssub.s32 256, 256
      %27 = vsyncadd [#allocation7], %s26
      %s28 = sshll.u32 [#allocation6], 4
      %s29 = int_to_ptr.vmem [resolvable:$true] %s28
      %34 = dma.hbm_to_vmem [thread:$0]  %s1, 256, %s29, [#allocation7], 64, 64, 4
    $region9: #{tpu_custom_call.1} parent=1 // pred_fallthru
      _
    // Predicated region
    $region10: #{tpu_custom_call.1} parent=1 // pred_check
      _
    $region11: #{tpu_custom_call.1} parent=1 // pred_check_branch
      %36 = sbr.rel (0) target = $region13
    $region12: #{tpu_custom_call.1} parent=1 // pred_region
      _
    $region13: #{tpu_custom_call.1} parent=1 // pred_fallthru
      _
    // Predicated region
    $region14: #{tpu_custom_call.1} parent=1 // pred_check
      _
    $region15: #{tpu_custom_call.1} parent=1 // pred_check_branch
      %38 = sbr.rel (0) target = $region17
    $region16: #{tpu_custom_call.1} parent=1 // pred_region
      %s40 = ssub.s32 2048, 2048
      %41 = vsyncadd [#allocation7], %s40
      %s42 = sshll.u32 [#allocation8], 4
      %s43 = int_to_ptr.vmem [resolvable:$true] %s42
      %48 = dma.hbm_to_vmem [thread:$0]  %s3, 2048, %s43, [#allocation7], 128, 128, 8
    $region17: #{tpu_custom_call.1} parent=1 // pred_fallthru
      _
    // Predicated region
    $region18: #{tpu_custom_call.1} parent=1 // pred_check
      _
    $region19: #{tpu_custom_call.1} parent=1 // pred_check_branch
      %50 = sbr.rel (0) target = $region21
    $region20: #{tpu_custom_call.1} parent=1 // pred_region
      _
    $region21: #{tpu_custom_call.1} parent=1 // pred_fallthru
      _
    // Predicated region
    $region22: #{tpu_custom_call.1} parent=1 // pred_check
      _
    $region23: #{tpu_custom_call.1} parent=1 // pred_check_branch
      %52 = sbr.rel (0) target = $region25
    $region24: #{tpu_custom_call.1} parent=1 // pred_region
      %53 = dma.done [#allocation4], 16
    $region25: #{tpu_custom_call.1} parent=1 // pred_fallthru
      _
    // Predicated region
    $region26: #{tpu_custom_call.1} parent=1 // pred_check
      _
    $region27: #{tpu_custom_call.1} parent=1 // pred_check_branch
      %55 = sbr.rel (0) target = $region29
    $region28: #{tpu_custom_call.1} parent=1 // pred_region
      %56 = dma.done [#allocation7], 256
    $region29: #{tpu_custom_call.1} parent=1 // pred_fallthru
      _
    // Predicated region
    $region30: #{tpu_custom_call.1} parent=1 // pred_check
      _
    $region31: #{tpu_custom_call.1} parent=1 // pred_check_branch
      %58 = sbr.rel (0) target = $region33
    $region32: #{tpu_custom_call.1} parent=1 // pred_region
      %59 = dma.done [#allocation7], 2048
    $region33: #{tpu_custom_call.1} parent=1 // pred_fallthru
      _
    %p61 = scmp.eq.s32.totalorder 0, 0
    // Predicated region
    $region34: #{tpu_custom_call.1} parent=1 // pred_check
      %p62 = pneg %p61
    $region35: #{tpu_custom_call.1} parent=1 // pred_check_branch
      %64 = sbr.rel (%p62) target = $region37
    $region36: #{tpu_custom_call.1} parent=1 // pred_region
      %v65 = vld [vmem:[#allocation3] sm:$0x1]
      %v66 = vld [vmem:[#allocation6] sm:$0xf]
      %v67 = vld [vmem:[#allocation6 + $0x4] sm:$0xf]
      %v68 = vld [vmem:[#allocation6 + $0x8] sm:$0xf]
      %v69 = vld [vmem:[#allocation6 + $0xc] sm:$0xf]
      %v70 = vld [vmem:[%s2] sm:$0x1]
      %v72 = vlaneseq
      %v73 = vshrl.u32 %v72, 7
      %v74 = vsub.s32 0, %v73
      %v75 = vrot.slane %v70, %v74
      %v81 = vunpack.c.l.b16 %v66
      %v82 = vunpack.c.l.b16 %v67
      %v83 = vunpack.c.l.b16 %v68
      %v84 = vunpack.c.l.b16 %v69
      %v85 = vpack.c.b16 %v82, %v81
      %v86 = vpack.c.b16 %v84, %v83
      %vm89 = vcmask 261120
      %v91 = vsel %vm89, %v65, 0
      %93 = vmatprep.subr.bf16.mxu0 0
      %94 = vmatpush1.bf16.msra.mxu0 0
      %95 = vmatprep.subr.bf16.mxu0 0
      %96 = vmatpush1.bf16.msra.mxu0 0
      %97 = vmatprep.subr.bf16.mxu0 0
      %98 = vmatpush1.bf16.msra.mxu0 0
      %99 = vmatprep.subr.bf16.mxu0 0
      %100 = vmatpush1.bf16.msra.mxu0 0
      %101 = vmatprep.subr.bf16.mxu0 0
      %102 = vmatpush1.bf16.msra.mxu0 0
      %103 = vmatprep.subr.bf16.mxu0 0
      %104 = vmatpush1.bf16.msra.mxu0 0
      %105 = vmatprep.subr.bf16.mxu0 0
      %106 = vmatpush1.bf16.msra.mxu0 %v86
      %107 = vmatprep.subr.bf16.mxu0 0
      %108 = vmatpush1.bf16.msra.mxu0 %v85
      %109 = vmatprep.subr.bf16.mxu0 0
      %110 = vmatpush2.bf16.msra.mxu0 0
      %111 = vmatprep.subr.bf16.mxu0 0
      %112 = vmatpush2.bf16.msra.mxu0 0
      %113 = vmatprep.subr.bf16.mxu0 0
      %114 = vmatpush2.bf16.msra.mxu0 0
      %115 = vmatprep.subr.bf16.mxu0 0
      %116 = vmatpush2.bf16.msra.mxu0 0
      %117 = vmatprep.subr.bf16.mxu0 0
      %118 = vmatpush2.bf16.msra.mxu0 0
      %119 = vmatprep.subr.bf16.mxu0 0
      %120 = vmatpush2.bf16.msra.mxu0 0
      %121 = vmatprep.subr.bf16.mxu0 0
      %122 = vmatpush2.bf16.msra.mxu0 0
      %123 = vmatprep.subr.bf16.mxu0 0
      %124 = vmatpush2.bf16.msra.mxu0 0
      %125 = vmatprep.mubr.bf16.mxu0 0
      %126 = vmatmul.mubr.bf16.gmra.mxu0 %v91
      %v127 = vpop.f32.mrf.mxu0
      %v128 = vadd.f32 %v75, %v127
      %v129 = vpop.f32.mrf.mxu0
      %v130 = vpop.f32.mrf.mxu0
      %v131 = vpop.f32.mrf.mxu0
      %132 = vdwg.mxu0
      %v133 = vxor.u32 %v128, 2147483648
      %v134 = vmul.f32 %v133, 1.442695
      %v135 = vpow.pop %v134
      %v136 = vadd.f32 %v135, 1.0
      %v137 = vrcp.pop %v136
      %v138 = vmul.f32 1.0, %v137
      %v139 = vmul.f32 %v128, %v138
      %v140 = vpack.c.bf16 %v139, %v139
      %141 = vst [vmem:[#allocation2] sm:$0x1] %v140
    $region37: #{tpu_custom_call.1} parent=1 // pred_fallthru
      _
    %v142 = vld [vmem:[#allocation2] sm:$0x1]
    %v143 = vld [vmem:[#allocation8] sm:$0xff]
    %v144 = vld [vmem:[#allocation8 + $0x8] sm:$0xff]
    %v145 = vld [vmem:[#allocation8 + $0x10] sm:$0xff]
    %v146 = vld [vmem:[#allocation8 + $0x18] sm:$0xff]
    %v147 = vld [vmem:[#allocation8 + $0x20] sm:$0xff]
    %v148 = vld [vmem:[#allocation8 + $0x28] sm:$0xff]
    %v149 = vld [vmem:[#allocation8 + $0x30] sm:$0xff]
    %v150 = vld [vmem:[#allocation8 + $0x38] sm:$0xff]
    %v151 = vld [vmem:[#allocation8 + $0x40] sm:$0xff]
    %v152 = vld [vmem:[#allocation8 + $0x48] sm:$0xff]
    %v153 = vld [vmem:[#allocation8 + $0x50] sm:$0xff]
    %v154 = vld [vmem:[#allocation8 + $0x58] sm:$0xff]
    %v155 = vld [vmem:[#allocation8 + $0x60] sm:$0xff]
    %v156 = vld [vmem:[#allocation8 + $0x68] sm:$0xff]
    %v157 = vld [vmem:[#allocation8 + $0x70] sm:$0xff]
    %v158 = vld [vmem:[#allocation8 + $0x78] sm:$0xff]
    %v159 = vld [vmem:[%s4] sm:$0x3]
    %v161 = vlaneseq
    %v162 = vshrl.u32 %v161, 7
    %v163 = vsub.s32 0, %v162
    %v164 = vrot.slane %v159, %v163
    %v165 = vlaneseq
    %v166 = vshrl.u32 %v165, 7
    %v167 = vsub.s32 1, %v166
    %v168 = vrot.slane %v159, %v167
    %v187 = vunpack.c.l.b16 %v143
    %v188 = vunpack.c.h.b16 %v143
    %v189 = vunpack.c.l.b16 %v144
    %v190 = vunpack.c.h.b16 %v144
    %v191 = vunpack.c.l.b16 %v145
    %v192 = vunpack.c.h.b16 %v145
    %v193 = vunpack.c.l.b16 %v146
    %v194 = vunpack.c.h.b16 %v146
    %v195 = vunpack.c.l.b16 %v147
    %v196 = vunpack.c.h.b16 %v147
    %v197 = vunpack.c.l.b16 %v148
    %v198 = vunpack.c.h.b16 %v148
    %v199 = vunpack.c.l.b16 %v149
    %v200 = vunpack.c.h.b16 %v149
    %v201 = vunpack.c.l.b16 %v150
    %v202 = vunpack.c.h.b16 %v150
    %v203 = vunpack.c.l.b16 %v151
    %v204 = vunpack.c.h.b16 %v151
    %v205 = vunpack.c.l.b16 %v152
    %v206 = vunpack.c.h.b16 %v152
    %v207 = vunpack.c.l.b16 %v153
    %v208 = vunpack.c.h.b16 %v153
    %v209 = vunpack.c.l.b16 %v154
    %v210 = vunpack.c.h.b16 %v154
    %v211 = vunpack.c.l.b16 %v155
    %v212 = vunpack.c.h.b16 %v155
    %v213 = vunpack.c.l.b16 %v156
    %v214 = vunpack.c.h.b16 %v156
    %v215 = vunpack.c.l.b16 %v157
    %v216 = vunpack.c.h.b16 %v157
    %v217 = vunpack.c.l.b16 %v158
    %v218 = vunpack.c.h.b16 %v158
    %v219 = vpack.c.b16 %v189, %v187
    %v220 = vpack.c.b16 %v190, %v188
    %v221 = vpack.c.b16 %v193, %v191
    %v222 = vpack.c.b16 %v194, %v192
    %v223 = vpack.c.b16 %v197, %v195
    %v224 = vpack.c.b16 %v198, %v196
    %v225 = vpack.c.b16 %v201, %v199
    %v226 = vpack.c.b16 %v202, %v200
    %v227 = vpack.c.b16 %v205, %v203
    %v228 = vpack.c.b16 %v206, %v204
    %v229 = vpack.c.b16 %v209, %v207
    %v230 = vpack.c.b16 %v210, %v208
    %v231 = vpack.c.b16 %v213, %v211
    %v232 = vpack.c.b16 %v214, %v212
    %v233 = vpack.c.b16 %v217, %v215
    %v234 = vpack.c.b16 %v218, %v216
    %251 = vmatprep.subr.bf16.mxu0 %v234
    %252 = vmatpush1.bf16.msra.mxu0 %v233
    %253 = vmatprep.subr.bf16.mxu0 %v232
    %254 = vmatpush1.bf16.msra.mxu0 %v231
    %255 = vmatprep.subr.bf16.mxu0 %v230
    %256 = vmatpush1.bf16.msra.mxu0 %v229
    %257 = vmatprep.subr.bf16.mxu0 %v228
    %258 = vmatpush1.bf16.msra.mxu0 %v227
    %259 = vmatprep.subr.bf16.mxu0 %v226
    %260 = vmatpush1.bf16.msra.mxu0 %v225
    %261 = vmatprep.subr.bf16.mxu0 %v224
    %262 = vmatpush1.bf16.msra.mxu0 %v223
    %263 = vmatprep.subr.bf16.mxu0 %v222
    %264 = vmatpush1.bf16.msra.mxu0 %v221
    %265 = vmatprep.subr.bf16.mxu0 %v220
    %266 = vmatpush1.bf16.msra.mxu0 %v219
    %267 = vmatprep.subr.bf16.mxu0 0
    %268 = vmatpush2.bf16.msra.mxu0 0
    %269 = vmatprep.subr.bf16.mxu0 0
    %270 = vmatpush2.bf16.msra.mxu0 0
    %271 = vmatprep.subr.bf16.mxu0 0
    %272 = vmatpush2.bf16.msra.mxu0 0
    %273 = vmatprep.subr.bf16.mxu0 0
    %274 = vmatpush2.bf16.msra.mxu0 0
    %275 = vmatprep.subr.bf16.mxu0 0
    %276 = vmatpush2.bf16.msra.mxu0 0
    %277 = vmatprep.subr.bf16.mxu0 0
    %278 = vmatpush2.bf16.msra.mxu0 0
    %279 = vmatprep.subr.bf16.mxu0 0
    %280 = vmatpush2.bf16.msra.mxu0 0
    %281 = vmatprep.subr.bf16.mxu0 0
    %282 = vmatpush2.bf16.msra.mxu0 0
    %283 = vmatprep.mubr.bf16.mxu0 0
    %284 = vmatmul.mubr.bf16.gmra.mxu0 %v142
    %v285 = vpop.f32.mrf.mxu0
    %v286 = vadd.f32 %v164, %v285
    %v287 = vpop.f32.mrf.mxu0
    %v288 = vadd.f32 %v168, %v287
    %v289 = vpop.f32.mrf.mxu0
    %v290 = vpop.f32.mrf.mxu0
    %291 = vdwg.mxu0
    %v294 = vcombine.low %v286, %v288
    %v296 = vunpack.c.l.s4 1983009808
    %v297 = vunpack.c.0.s8 %v296
    %v298 = vlaneseq
    %v299 = vshrl.u32 %v298, 7
    %v300 = vsub.s32 %v297, %v299
    %v301 = vrot.slane %v294, %v300
    %303 = vst [vmem:[#allocation9] sm:$0xf] %v301
    // Predicated region
    $region38: #{tpu_custom_call.1} parent=1 // pred_check
      _
    $region39: #{tpu_custom_call.1} parent=1 // pred_check_branch
      %305 = sbr.rel (0) target = $region41
    $region40: #{tpu_custom_call.1} parent=1 // pred_region
      %s307 = ssub.s32 64, 64
      %308 = vsyncadd [#allocation5], %s307
      %s310 = sshll.u32 [#allocation9], 4
      %s311 = int_to_ptr.vmem [resolvable:$true] %s310
      %313 = dma.vmem_to_hbm [thread:$0]  %s311, 64, %s5, [#allocation5]
    $region41: #{tpu_custom_call.1} parent=1 // pred_fallthru
      _
    // Predicated region
    $region42: #{tpu_custom_call.1} parent=1 // pred_check
      _
    $region43: #{tpu_custom_call.1} parent=1 // pred_check_branch
      %315 = sbr.rel (0) target = $region45
    $region44: #{tpu_custom_call.1} parent=1 // pred_region
      %316 = dma.done [#allocation5], 64
    $region45: #{tpu_custom_call.1} parent=1 // pred_fallthru
      _
    %317 = vsyncpa [#allocation4], 1
    %318 = vsyncpa [#allocation7], 1
    %319 = vsyncpa [#allocation5], 1

</llo_original>
